<compile_context>
chip_gen: v7x
topology: tpu7x:2x2x1
jax: 0.10.0
libtpu: 0.0.40
codegen_flags: <defaults>
</compile_context>

<pallas_src>
import jax
import jax.numpy as jnp
from jax.experimental import pallas as pl
from jax.experimental.pallas import tpu as pltpu

_IMAGE = 784                            # input features (28*28)
_H0, _H1, _NCLS = 100, 50, 10           # true layer widths
_H0P, _H1P, _NCLSP = 128, 128, 128      # lane-padded widths (multiples of 128)
_BN_EPS = 1e-5                          # PyTorch BatchNorm1d default eps
_NEG = -1e30                            # finite "-inf" baked into padded fc2 bias


def _mlp_bn_logsoftmax_kernel(x_ref,
                              w0_ref, b0_ref,
                              w1_ref, b1_ref,
                              w2_ref, b2_ref,
                              out_ref):
    # x stays f32 in HBM; cast to bf16 on the VMEM tile right before the MXU.
    x = x_ref[...].astype(jnp.bfloat16)                               # (TB, 784)

    # fc0 -> relu           (bn0 is folded into fc1's weights/bias at wrapper time)
    h0 = jnp.dot(x, w0_ref[...], preferred_element_type=jnp.float32)
    h0 = jnp.maximum(h0 + b0_ref[...], 0.0)

    # (bn0 ∘) fc1 -> relu   (bn1 is folded into fc2)
    h1 = jnp.dot(h0.astype(jnp.bfloat16), w1_ref[...],
                 preferred_element_type=jnp.float32)
    h1 = jnp.maximum(h1 + b1_ref[...], 0.0)

    # (bn1 ∘) fc2; padded lanes (cols >= 10) carry bias -1e30 so they vanish below.
    logits = jnp.dot(h1.astype(jnp.bfloat16), w2_ref[...],
                     preferred_element_type=jnp.float32) + b2_ref[...]

    # log_softmax along dim=1 (numerically stable)
    m = jnp.max(logits, axis=-1, keepdims=True)
    s = logits - m
    lse = jnp.log(jnp.sum(jnp.exp(s), axis=-1, keepdims=True))
    out_ref[...] = s - lse


def _round_up(n, m):
    return ((n + m - 1) // m) * m


def _pad2(a, rows, cols):
    return jnp.pad(a, ((0, rows - a.shape[0]), (0, cols - a.shape[1])))


def _bn_scale_shift(gamma, beta, running_mean, running_var):
    scale = gamma / jnp.sqrt(running_var + _BN_EPS)
    shift = beta - running_mean * scale
    return scale.astype(jnp.float32), shift.astype(jnp.float32)


def _pick_batch_tile(b, max_tile):
    """Batch tile: exact fit for small batches; otherwise aim for an even number of
    grid steps (>= 2) so both v7x TensorCores get balanced work."""
    if b <= 256:
        return b
    steps = max(2, -(-b // max_tile))
    if steps % 2:
        steps += 1
    tb = _round_up(-(-b // steps), 16)      # 16-row alignment (bf16 sublane packing)
    return min(tb, max_tile)


def model_db_forward(x, params, *, max_batch_tile=2048):
    """Forward pass of Model_Db (eval-mode BN). x: any shape reshapeable to (-1, 784).
    Returns (B, 10) f32 log-probabilities."""
    # --- fold BN into the following Linear, pad, cast (torch weight is (out, in)) ---
    w0, b0 = params["fc0.weight"], params["fc0.bias"]
    w1, b1 = params["fc1.weight"], params["fc1.bias"]
    w2, b2 = params["fc2.weight"], params["fc2.bias"]

    s0, t0 = _bn_scale_shift(params["bn0.weight"], params["bn0.bias"],
                             params["bn0.running_mean"], params["bn0.running_var"])
    s1, t1 = _bn_scale_shift(params["bn1.weight"], params["bn1.bias"],
                             params["bn1.running_mean"], params["bn1.running_var"])

    w0t = w0.T.astype(jnp.float32)                     # (784, 100)
    w1f = s0[:, None] * w1.T.astype(jnp.float32)       # (100, 50)   bn0 folded in
    b1f = t0 @ w1.T.astype(jnp.float32) + b1           # (50,)
    w2f = s1[:, None] * w2.T.astype(jnp.float32)       # (50, 10)    bn1 folded in
    b2f = t1 @ w2.T.astype(jnp.float32) + b2           # (10,)

    w0p = _pad2(w0t, _IMAGE, _H0P).astype(jnp.bfloat16)     # (784, 128)
    w1p = _pad2(w1f, _H0P, _H1P).astype(jnp.bfloat16)       # (128, 128)
    w2p = _pad2(w2f, _H1P, _NCLSP).astype(jnp.bfloat16)     # (128, 128)
    b0p = jnp.pad(b0.astype(jnp.float32), (0, _H0P - _H0)).reshape(1, _H0P)
    b1p = jnp.pad(b1f, (0, _H1P - _H1)).reshape(1, _H1P)
    # mask for padded logit lanes baked into the bias (padded w2p cols are zero)
    b2p = jnp.concatenate(
        [b2f.astype(jnp.float32), jnp.full((_NCLSP - _NCLS,), _NEG, jnp.float32)]
    ).reshape(1, _NCLSP)

    # --- batch tiling: no wrapper pad / cast of x -------------------------------
    x2d = x.reshape(-1, _IMAGE)
    b = x2d.shape[0]
    tb = _pick_batch_tile(b, max_batch_tile)
    grid = pl.cdiv(b, tb)                    # ragged last tile handled by Pallas

    const = lambda shape: pl.BlockSpec(shape, lambda i: (0, 0))   # resident weights
    out = pl.pallas_call(
        _mlp_bn_logsoftmax_kernel,
        out_shape=jax.ShapeDtypeStruct((b, _NCLSP), jnp.float32),
        grid=(grid,),
        in_specs=[
            pl.BlockSpec((tb, _IMAGE), lambda i: (i, 0)),         # x streamed over batch
            const((_IMAGE, _H0P)), const((1, _H0P)),
            const((_H0P, _H1P)), const((1, _H1P)),
            const((_H1P, _NCLSP)), const((1, _NCLSP)),
        ],
        out_specs=pl.BlockSpec((tb, _NCLSP), lambda i: (i, 0)),   # lane-dense output
        compiler_params=pltpu.CompilerParams(
            dimension_semantics=("parallel",),                    # megacore on v7x
            vmem_limit_bytes=48 * 1024 * 1024),                   # room for tb=2048
    )(x2d, w0p, b0p, w1p, b1p, w2p, b2p)
    return out[:, :_NCLS]


def init_params(key):
    """PyTorch-default init: Linear ~ U(+-1/sqrt(fan_in)); BN gamma=1, beta=0,
    running_mean=0, running_var=1. Weights stored in torch layout (out, in)."""
    def linear(k, fan_in, fan_out):
        kw, kb = jax.random.split(k)
        bound = 1.0 / jnp.sqrt(fan_in)
        w = jax.random.uniform(kw, (fan_out, fan_in), jnp.float32, -bound, bound)
        bb = jax.random.uniform(kb, (fan_out,), jnp.float32, -bound, bound)
        return w, bb

    k0, k1, k2 = jax.random.split(key, 3)
    w0, b0 = linear(k0, _IMAGE, _H0)
    w1, b1 = linear(k1, _H0, _H1)
    w2, b2 = linear(k2, _H1, _NCLS)
    return {
        "fc0.weight": w0, "fc0.bias": b0,
        "bn0.weight": jnp.ones((_H0,), jnp.float32),
        "bn0.bias": jnp.zeros((_H0,), jnp.float32),
        "bn0.running_mean": jnp.zeros((_H0,), jnp.float32),
        "bn0.running_var": jnp.ones((_H0,), jnp.float32),
        "fc1.weight": w1, "fc1.bias": b1,
        "bn1.weight": jnp.ones((_H1,), jnp.float32),
        "bn1.bias": jnp.zeros((_H1,), jnp.float32),
        "bn1.running_mean": jnp.zeros((_H1,), jnp.float32),
        "bn1.running_var": jnp.ones((_H1,), jnp.float32),
        "fc2.weight": w2, "fc2.bias": b2,
    }


def _reference_forward(x, params):
    """Pure-JAX f32 reference (eval-mode BN) for correctness checking."""
    x2d = x.reshape(-1, _IMAGE).astype(jnp.float32)

    def bn(h, p):
        g, be = params[p + ".weight"], params[p + ".bias"]
        m, v = params[p + ".running_mean"], params[p + ".running_var"]
        return (h - m) / jnp.sqrt(v + _BN_EPS) * g + be

    h = jnp.maximum(x2d @ params["fc0.weight"].T + params["fc0.bias"], 0.0)
    h = bn(h, "bn0")
    h = jnp.maximum(h @ params["fc1.weight"].T + params["fc1.bias"], 0.0)
    h = bn(h, "bn1")
    logits = h @ params["fc2.weight"].T + params["fc2.bias"]
    return jax.nn.log_softmax(logits, axis=-1)


if __name__ == "__main__":
    key = jax.random.PRNGKey(0)
    k_in, k_params = jax.random.split(key)

    # MNIST-like input: (batch=2, 1, 28, 28) -> flattened internally to (2, 784).
    x = jax.random.normal(k_in, (2, 1, 28, 28), dtype=jnp.float32)
    params = init_params(k_params)

    out = jax.block_until_ready(model_db_forward(x, params))
    assert out.shape == (2, 10)

    # log-probs must exponentiate-sum to 1 per row
    row_sums = jnp.sum(jnp.exp(out), axis=-1)
    assert bool(jnp.all(jnp.abs(row_sums - 1.0) < 1e-4))

    # match pure-JAX f32 reference (kernel matmuls use bf16 inputs -> loose tol)
    ref = _reference_forward(x, params)
    max_err = float(jnp.max(jnp.abs(out - ref)))
    assert max_err < 5e-2, max_err

    print("KERNEL_OK")
</pallas_src>

<mosaic_0001>
module attributes {stable_mosaic.version = 11 : i64} {
  func.func @_mlp_bn_logsoftmax_kernel(%arg0: i32, %arg1: memref<2x784xf32, #tpu.memory_space<vmem>>, %arg2: memref<784x128xbf16, #tpu.memory_space<vmem>>, %arg3: memref<1x128xf32, #tpu.memory_space<vmem>>, %arg4: memref<128x128xbf16, #tpu.memory_space<vmem>>, %arg5: memref<1x128xf32, #tpu.memory_space<vmem>>, %arg6: memref<128x128xbf16, #tpu.memory_space<vmem>>, %arg7: memref<1x128xf32, #tpu.memory_space<vmem>>, %arg8: memref<2x128xf32, #tpu.memory_space<vmem>>) attributes {dimension_semantics = [#tpu.dimension_semantics<parallel>], iteration_bounds = array<i64: 1>, scalar_prefetch = 0 : i64, scratch_operands = 0 : i64, tpu.core_type = #tpu.core_type<tc>, window_params = [{transform_indices = @transform_0, window_bounds = array<i64: 2, 784>}, {pipeline_mode = #tpu.pipeline_mode<synchronous>, transform_indices = @transform_1, window_bounds = array<i64: 784, 128>}, {pipeline_mode = #tpu.pipeline_mode<synchronous>, transform_indices = @transform_2, window_bounds = array<i64: 1, 128>}, {pipeline_mode = #tpu.pipeline_mode<synchronous>, transform_indices = @transform_3, window_bounds = array<i64: 128, 128>}, {pipeline_mode = #tpu.pipeline_mode<synchronous>, transform_indices = @transform_4, window_bounds = array<i64: 1, 128>}, {pipeline_mode = #tpu.pipeline_mode<synchronous>, transform_indices = @transform_5, window_bounds = array<i64: 128, 128>}, {pipeline_mode = #tpu.pipeline_mode<synchronous>, transform_indices = @transform_6, window_bounds = array<i64: 1, 128>}, {transform_indices = @transform_7, window_bounds = array<i64: 2, 128>}]} {
    %c0 = arith.constant 0 : index
    %c0_0 = arith.constant 0 : index
    %0 = vector.load %arg1[%c0, %c0_0] : memref<2x784xf32, #tpu.memory_space<vmem>>, vector<2x784xf32>
    %1 = arith.truncf %0 : vector<2x784xf32> to vector<2x784xbf16>
    %c0_1 = arith.constant 0 : index
    %c0_2 = arith.constant 0 : index
    %2 = vector.load %arg2[%c0_1, %c0_2] : memref<784x128xbf16, #tpu.memory_space<vmem>>, vector<784x128xbf16>
    %cst = arith.constant dense<0.000000e+00> : vector<2x128xf32>
    %3 = tpu.matmul %1, %2, %cst {dimension_numbers = #tpu.dot_dimension_numbers<[1], [0], [0], [1], [0, 0, 1, 1], [], []>} : vector<2x784xbf16>, vector<784x128xbf16>, vector<2x128xf32> -> vector<2x128xf32>
    %c0_3 = arith.constant 0 : index
    %c0_4 = arith.constant 0 : index
    %4 = vector.load %arg3[%c0_3, %c0_4] : memref<1x128xf32, #tpu.memory_space<vmem>>, vector<1x128xf32>
    %5 = vector.broadcast %4 : vector<1x128xf32> to vector<2x128xf32>
    %6 = arith.addf %3, %5 : vector<2x128xf32>
    %cst_5 = arith.constant 0.000000e+00 : f32
    %7 = vector.broadcast %cst_5 : f32 to vector<2x128xf32>
    %8 = arith.maximumf %6, %7 : vector<2x128xf32>
    %9 = arith.truncf %8 : vector<2x128xf32> to vector<2x128xbf16>
    %c0_6 = arith.constant 0 : index
    %c0_7 = arith.constant 0 : index
    %10 = vector.load %arg4[%c0_6, %c0_7] : memref<128x128xbf16, #tpu.memory_space<vmem>>, vector<128x128xbf16>
    %cst_8 = arith.constant dense<0.000000e+00> : vector<2x128xf32>
    %11 = tpu.matmul %9, %10, %cst_8 {dimension_numbers = #tpu.dot_dimension_numbers<[1], [0], [0], [1], [0, 0, 1, 1], [], []>} : vector<2x128xbf16>, vector<128x128xbf16>, vector<2x128xf32> -> vector<2x128xf32>
    %c0_9 = arith.constant 0 : index
    %c0_10 = arith.constant 0 : index
    %12 = vector.load %arg5[%c0_9, %c0_10] : memref<1x128xf32, #tpu.memory_space<vmem>>, vector<1x128xf32>
    %13 = vector.broadcast %12 : vector<1x128xf32> to vector<2x128xf32>
    %14 = arith.addf %11, %13 : vector<2x128xf32>
    %cst_11 = arith.constant 0.000000e+00 : f32
    %15 = vector.broadcast %cst_11 : f32 to vector<2x128xf32>
    %16 = arith.maximumf %14, %15 : vector<2x128xf32>
    %17 = arith.truncf %16 : vector<2x128xf32> to vector<2x128xbf16>
    %c0_12 = arith.constant 0 : index
    %c0_13 = arith.constant 0 : index
    %18 = vector.load %arg6[%c0_12, %c0_13] : memref<128x128xbf16, #tpu.memory_space<vmem>>, vector<128x128xbf16>
    %cst_14 = arith.constant dense<0.000000e+00> : vector<2x128xf32>
    %19 = tpu.matmul %17, %18, %cst_14 {dimension_numbers = #tpu.dot_dimension_numbers<[1], [0], [0], [1], [0, 0, 1, 1], [], []>} : vector<2x128xbf16>, vector<128x128xbf16>, vector<2x128xf32> -> vector<2x128xf32>
    %c0_15 = arith.constant 0 : index
    %c0_16 = arith.constant 0 : index
    %20 = vector.load %arg7[%c0_15, %c0_16] : memref<1x128xf32, #tpu.memory_space<vmem>>, vector<1x128xf32>
    %21 = vector.broadcast %20 : vector<1x128xf32> to vector<2x128xf32>
    %22 = arith.addf %19, %21 : vector<2x128xf32>
    %cst_17 = arith.constant dense<0xFF800000> : vector<2xf32>
    %23 = vector.multi_reduction <maximumf>, %22, %cst_17 [1] : vector<2x128xf32> to vector<2xf32>
    %24 = vector.shape_cast %23 : vector<2xf32> to vector<2x1xf32>
    %25 = vector.broadcast %24 : vector<2x1xf32> to vector<2x128xf32>
    %26 = arith.subf %22, %25 : vector<2x128xf32>
    %27 = math.exp %26 : vector<2x128xf32>
    %cst_18 = arith.constant dense<0.000000e+00> : vector<2xf32>
    %28 = vector.multi_reduction <add>, %27, %cst_18 [1] : vector<2x128xf32> to vector<2xf32>
    %29 = vector.shape_cast %28 : vector<2xf32> to vector<2x1xf32>
    %30 = math.log %29 : vector<2x1xf32>
    %31 = vector.broadcast %30 : vector<2x1xf32> to vector<2x128xf32>
    %32 = arith.subf %26, %31 : vector<2x128xf32>
    %c0_19 = arith.constant 0 : index
    %c0_20 = arith.constant 0 : index
    %33 = vector.load %arg8[%c0_19, %c0_20] : memref<2x128xf32, #tpu.memory_space<vmem>>, vector<2x128xf32>
    tpu.vector_store %arg8[%c0_19, %c0_20], %32 {strides = array<i32>} : memref<2x128xf32, #tpu.memory_space<vmem>>, vector<2x128xf32>,
    return
  }
  func.func @transform_0(%arg0: i32) -> (i32, i32) {
    %c0_i32 = arith.constant 0 : i32
    %c0_i32_0 = arith.constant 0 : i32
    return %arg0, %c0_i32 : i32, i32
  }
  func.func @transform_1(%arg0: i32) -> (i32, i32) {
    %c0_i32 = arith.constant 0 : i32
    %c0_i32_0 = arith.constant 0 : i32
    %c0_i32_1 = arith.constant 0 : i32
    return %c0_i32, %c0_i32_0 : i32, i32
  }
  func.func @transform_2(%arg0: i32) -> (i32, i32) {
    %c0_i32 = arith.constant 0 : i32
    %c0_i32_0 = arith.constant 0 : i32
    %c0_i32_1 = arith.constant 0 : i32
    return %c0_i32, %c0_i32_0 : i32, i32
  }
  func.func @transform_3(%arg0: i32) -> (i32, i32) {
    %c0_i32 = arith.constant 0 : i32
    %c0_i32_0 = arith.constant 0 : i32
    %c0_i32_1 = arith.constant 0 : i32
    return %c0_i32, %c0_i32_0 : i32, i32
  }
  func.func @transform_4(%arg0: i32) -> (i32, i32) {
    %c0_i32 = arith.constant 0 : i32
    %c0_i32_0 = arith.constant 0 : i32
    %c0_i32_1 = arith.constant 0 : i32
    return %c0_i32, %c0_i32_0 : i32, i32
  }
  func.func @transform_5(%arg0: i32) -> (i32, i32) {
    %c0_i32 = arith.constant 0 : i32
    %c0_i32_0 = arith.constant 0 : i32
    %c0_i32_1 = arith.constant 0 : i32
    return %c0_i32, %c0_i32_0 : i32, i32
  }
  func.func @transform_6(%arg0: i32) -> (i32, i32) {
    %c0_i32 = arith.constant 0 : i32
    %c0_i32_0 = arith.constant 0 : i32
    %c0_i32_1 = arith.constant 0 : i32
    return %c0_i32, %c0_i32_0 : i32, i32
  }
  func.func @transform_7(%arg0: i32) -> (i32, i32) {
    %c0_i32 = arith.constant 0 : i32
    %c0_i32_0 = arith.constant 0 : i32
    return %arg0, %c0_i32 : i32, i32
  }
}

</mosaic_0001>

<llo_original>
// kernel: tpu_custom_call.1
$region0: #{tpu_custom_call.1}
  #allocation0 [shape = 'u32[]', space=smem, size = 0x4, offset = 0x4, fixed_abs, tag = 'smem constant byte address 0x4 - core index']
  #allocation1 [shape = 'u32[144,128]{1,0:T(1,128)}', space=vmem, size = 0x12000, scoped, tag = 'internal scratch']
  %s0 = inlined_call_operand.hbm [shape: f32[2,784], index: 0, kind: input, shape index: {}]
  %s1 = inlined_call_operand.hbm [shape: bf16[784,128], index: 1, kind: input, shape index: {}]
  %s2 = inlined_call_operand.vmem [shape: f32[1,128], index: 2, kind: input, shape index: {}]
  %s3 = inlined_call_operand.hbm [shape: bf16[128,128], index: 3, kind: input, shape index: {}]
  %s4 = inlined_call_operand.vmem [shape: f32[1,128], index: 4, kind: input, shape index: {}]
  %s5 = inlined_call_operand.hbm [shape: bf16[128,128], index: 5, kind: input, shape index: {}]
  %s6 = inlined_call_operand.vmem [shape: f32[1,128], index: 6, kind: input, shape index: {}]
  %s7 = inlined_call_operand.hbm [shape: f32[2,128], index: 7, kind: output, shape index: {}]
  %s8 = sld [smem:[#allocation0]]
  $region54: #{tpu_custom_call.1} parent=0
    _
  %s10 = ssub.s32 1, %s8
  %s11 = scalar_select 0, %s10, %s8
  $region1: #{tpu_custom_call.1} parent=0
    #allocation2 [shape = 'u8[7168]{0}', space=vmem, size = 0x1c00, scoped, tag = 'input window, operand 0, single buffered']
    #allocation3 [shape = 's32[1]{0}', space=sflag, size = 0x4, scoped, tag = 'scoped memory for tpu_custom_call.1']
    #allocation4 [shape = 's32[1]{0}', space=sflag, size = 0x4, scoped, tag = 'scoped memory for tpu_custom_call.1']
    #allocation5 [shape = 'u8[200704]{0}', space=vmem, size = 0x31000, scoped, tag = 'input window, operand 1, single buffered']
    #allocation6 [shape = 's32[1]{0}', space=sflag, size = 0x4, scoped, tag = 'scoped memory for tpu_custom_call.1']
    #allocation7 [shape = 'u8[32768]{0}', space=vmem, size = 0x8000, scoped, tag = 'input window, operand 3, single buffered']
    #allocation8 [shape = 'u8[32768]{0}', space=vmem, size = 0x8000, scoped, tag = 'input window, operand 5, single buffered']
    #allocation9 [shape = 's32[1]{0}', space=sflag, size = 0x4, scoped, tag = 'scoped memory for tpu_custom_call.1']
    #allocation10 [shape = 'u8[1024]{0}', space=vmem, size = 0x400, scoped, tag = 'output window, operand 0, single buffered']
    %12 = vsyncpa [#allocation3], 0
    %13 = vsyncpa [#allocation6], 0
    %14 = vsyncpa [#allocation9], 0
    %15 = vsyncpa [#allocation4], 0
    // Predicated region
    $region2: #{tpu_custom_call.1} parent=1 // pred_check
      _
    $region3: #{tpu_custom_call.1} parent=1 // pred_check_branch
      %17 = sbr.rel (0) target = $region5
    $region4: #{tpu_custom_call.1} parent=1 // pred_region
      %s19 = ssub.s32 224, 224
      %20 = vsyncadd [#allocation3], %s19
      %s22 = sshll.u32 [#allocation2], 4
      %s23 = int_to_ptr.vmem [resolvable:$true] %s22
      %25 = dma.hbm_to_vmem [thread:$0]  %s0, 224, %s23, [#allocation3]
    $region5: #{tpu_custom_call.1} parent=1 // pred_fallthru
      _
    // Predicated region
    $region6: #{tpu_custom_call.1} parent=1 // pred_check
      _
    $region7: #{tpu_custom_call.1} parent=1 // pred_check_branch
      %27 = sbr.rel (0) target = $region9
    $region8: #{tpu_custom_call.1} parent=1 // pred_region
      %s29 = ssub.s32 6272, 6272
      %30 = vsyncadd [#allocation6], %s29
      %s31 = sshll.u32 [#allocation5], 4
      %s32 = int_to_ptr.vmem [resolvable:$true] %s31
      %37 = dma.hbm_to_vmem [thread:$0]  %s1, 6272, %s32, [#allocation6], 64, 64, 4
    $region9: #{tpu_custom_call.1} parent=1 // pred_fallthru
      _
    // Predicated region
    $region10: #{tpu_custom_call.1} parent=1 // pred_check
      _
    $region11: #{tpu_custom_call.1} parent=1 // pred_check_branch
      %39 = sbr.rel (0) target = $region13
    $region12: #{tpu_custom_call.1} parent=1 // pred_region
      _
    $region13: #{tpu_custom_call.1} parent=1 // pred_fallthru
      _
    // Predicated region
    $region14: #{tpu_custom_call.1} parent=1 // pred_check
      _
    $region15: #{tpu_custom_call.1} parent=1 // pred_check_branch
      %41 = sbr.rel (0) target = $region17
    $region16: #{tpu_custom_call.1} parent=1 // pred_region
      %s43 = ssub.s32 1024, 1024
      %44 = vsyncadd [#allocation6], %s43
      %s45 = sshll.u32 [#allocation7], 4
      %s46 = int_to_ptr.vmem [resolvable:$true] %s45
      %51 = dma.hbm_to_vmem [thread:$0]  %s3, 1024, %s46, [#allocation6], 64, 64, 4
    $region17: #{tpu_custom_call.1} parent=1 // pred_fallthru
      _
    // Predicated region
    $region18: #{tpu_custom_call.1} parent=1 // pred_check
      _
    $region19: #{tpu_custom_call.1} parent=1 // pred_check_branch
      %53 = sbr.rel (0) target = $region21
    $region20: #{tpu_custom_call.1} parent=1 // pred_region
      _
    $region21: #{tpu_custom_call.1} parent=1 // pred_fallthru
      _
    // Predicated region
    $region22: #{tpu_custom_call.1} parent=1 // pred_check
      _
    $region23: #{tpu_custom_call.1} parent=1 // pred_check_branch
      %55 = sbr.rel (0) target = $region25
    $region24: #{tpu_custom_call.1} parent=1 // pred_region
      %s57 = ssub.s32 1024, 1024
      %58 = vsyncadd [#allocation9], %s57
      %s59 = sshll.u32 [#allocation8], 4
      %s60 = int_to_ptr.vmem [resolvable:$true] %s59
      %65 = dma.hbm_to_vmem [thread:$0]  %s5, 1024, %s60, [#allocation9], 64, 64, 4
    $region25: #{tpu_custom_call.1} parent=1 // pred_fallthru
      _
    // Predicated region
    $region26: #{tpu_custom_call.1} parent=1 // pred_check
      _
    $region27: #{tpu_custom_call.1} parent=1 // pred_check_branch
      %67 = sbr.rel (0) target = $region29
    $region28: #{tpu_custom_call.1} parent=1 // pred_region
      _
    $region29: #{tpu_custom_call.1} parent=1 // pred_fallthru
      _
    // Predicated region
    $region30: #{tpu_custom_call.1} parent=1 // pred_check
      _
    $region31: #{tpu_custom_call.1} parent=1 // pred_check_branch
      %69 = sbr.rel (0) target = $region33
    $region32: #{tpu_custom_call.1} parent=1 // pred_region
      %70 = dma.done [#allocation3], 224
    $region33: #{tpu_custom_call.1} parent=1 // pred_fallthru
      _
    // Predicated region
    $region34: #{tpu_custom_call.1} parent=1 // pred_check
      _
    $region35: #{tpu_custom_call.1} parent=1 // pred_check_branch
      %72 = sbr.rel (0) target = $region37
    $region36: #{tpu_custom_call.1} parent=1 // pred_region
      %73 = dma.done [#allocation6], 6272
    $region37: #{tpu_custom_call.1} parent=1 // pred_fallthru
      _
    // Predicated region
    $region38: #{tpu_custom_call.1} parent=1 // pred_check
      _
    $region39: #{tpu_custom_call.1} parent=1 // pred_check_branch
      %75 = sbr.rel (0) target = $region41
    $region40: #{tpu_custom_call.1} parent=1 // pred_region
      %76 = dma.done [#allocation6], 1024
    $region41: #{tpu_custom_call.1} parent=1 // pred_fallthru
      _
    // Predicated region
    $region42: #{tpu_custom_call.1} parent=1 // pred_check
      _
    $region43: #{tpu_custom_call.1} parent=1 // pred_check_branch
      %78 = sbr.rel (0) target = $region45
    $region44: #{tpu_custom_call.1} parent=1 // pred_region
      %79 = dma.done [#allocation9], 1024
    $region45: #{tpu_custom_call.1} parent=1 // pred_fallthru
      _
    %v81 = vld [vmem:[#allocation2] sm:$0xff]
    %v82 = vld [vmem:[#allocation2 + $0x8] sm:$0x3f]
    %v85 = vcombine.high %v81, %v81
    %v87 = vunpack.c.l.s4 1983009808
    %v88 = vunpack.c.0.s8 %v87
    %v89 = vlaneseq
    %v90 = vshrl.u32 %v89, 7
    %v91 = vsub.s32 %v88, %v90
    %v92 = vrot.slane %v81, %v91
    %v94 = vunpack.c.l.s4 1983009808
    %v95 = vunpack.c.0.s8 %v94
    %v96 = vlaneseq
    %v97 = vshrl.u32 %v96, 7
    %v98 = vsub.s32 %v95, %v97
    %v99 = vrot.slane %v85, %v98
    %v100 = vcombine.high %v92, %v92
    %v101 = vcombine.high %v99, %v99
    %v102 = vcombine.high %v82, %v82
    %v104 = vunpack.c.l.s4 1983009808
    %v105 = vunpack.c.0.s8 %v104
    %v106 = vlaneseq
    %v107 = vshrl.u32 %v106, 7
    %v108 = vsub.s32 %v105, %v107
    %v109 = vrot.slane %v82, %v108
    %v111 = vunpack.c.l.s4 1983009808
    %v112 = vunpack.c.0.s8 %v111
    %v113 = vlaneseq
    %v114 = vshrl.u32 %v113, 7
    %v115 = vsub.s32 %v112, %v114
    %v116 = vrot.slane %v102, %v115
    %v117 = vcombine.high %v109, %v109
    %v125 = vpack.c.bf16 %v92, %v92
    %v126 = vpack.c.bf16 %v100, %v100
    %v127 = vpack.c.bf16 %v99, %v99
    %v128 = vpack.c.bf16 %v101, %v101
    %v129 = vpack.c.bf16 %v109, %v109
    %v130 = vpack.c.bf16 %v117, %v117
    %v131 = vpack.c.bf16 %v116, %v116
    %v132 = vld [vmem:[#allocation5] sm:$0xf]
    %v133 = vld [vmem:[#allocation5 + $0x4] sm:$0xf]
    %v134 = vld [vmem:[#allocation5 + $0x8] sm:$0xf]
    %v135 = vld [vmem:[#allocation5 + $0xc] sm:$0xf]
    %v136 = vld [vmem:[#allocation5 + $0x10] sm:$0xf]
    %v137 = vld [vmem:[#allocation5 + $0x14] sm:$0xf]
    %v138 = vld [vmem:[#allocation5 + $0x18] sm:$0xf]
    %v139 = vld [vmem:[#allocation5 + $0x1c] sm:$0xf]
    %v140 = vld [vmem:[#allocation5 + $0x20] sm:$0xf]
    %v141 = vld [vmem:[#allocation5 + $0x24] sm:$0xf]
    %v142 = vld [vmem:[#allocation5 + $0x28] sm:$0xf]
    %v143 = vld [vmem:[#allocation5 + $0x2c] sm:$0xf]
    %v144 = vld [vmem:[#allocation5 + $0x30] sm:$0xf]
    %v145 = vld [vmem:[#allocation5 + $0x34] sm:$0xf]
    %v146 = vld [vmem:[#allocation5 + $0x38] sm:$0xf]
    %v147 = vld [vmem:[#allocation5 + $0x3c] sm:$0xf]
    %v148 = vld [vmem:[#allocation5 + $0x40] sm:$0xf]
    %v149 = vld [vmem:[#allocation5 + $0x44] sm:$0xf]
    %v150 = vld [vmem:[#allocation5 + $0x48] sm:$0xf]
    %v151 = vld [vmem:[#allocation5 + $0x4c] sm:$0xf]
    %v152 = vld [vmem:[#allocation5 + $0x50] sm:$0xf]
    %v153 = vld [vmem:[#allocation5 + $0x54] sm:$0xf]
    %v154 = vld [vmem:[#allocation5 + $0x58] sm:$0xf]
    %v155 = vld [vmem:[#allocation5 + $0x5c] sm:$0xf]
    %v156 = vld [vmem:[#allocation5 + $0x60] sm:$0xf]
    %v157 = vld [vmem:[#allocation5 + $0x64] sm:$0xf]
    %v158 = vld [vmem:[#allocation5 + $0x68] sm:$0xf]
    %v159 = vld [vmem:[#allocation5 + $0x6c] sm:$0xf]
    %v160 = vld [vmem:[#allocation5 + $0x70] sm:$0xf]
    %v161 = vld [vmem:[#allocation5 + $0x74] sm:$0xf]
    %v162 = vld [vmem:[#allocation5 + $0x78] sm:$0xf]
    %v163 = vld [vmem:[#allocation5 + $0x7c] sm:$0xf]
    %v164 = vld [vmem:[#allocation5 + $0x80] sm:$0xf]
    %v165 = vld [vmem:[#allocation5 + $0x84] sm:$0xf]
    %v166 = vld [vmem:[#allocation5 + $0x88] sm:$0xf]
    %v167 = vld [vmem:[#allocation5 + $0x8c] sm:$0xf]
    %v168 = vld [vmem:[#allocation5 + $0x90] sm:$0xf]
    %v169 = vld [vmem:[#allocation5 + $0x94] sm:$0xf]
    %v170 = vld [vmem:[#allocation5 + $0x98] sm:$0xf]
    %v171 = vld [vmem:[#allocation5 + $0x9c] sm:$0xf]
    %v172 = vld [vmem:[#allocation5 + $0xa0] sm:$0xf]
    %v173 = vld [vmem:[#allocation5 + $0xa4] sm:$0xf]
    %v174 = vld [vmem:[#allocation5 + $0xa8] sm:$0xf]
    %v175 = vld [vmem:[#allocation5 + $0xac] sm:$0xf]
    %v176 = vld [vmem:[#allocation5 + $0xb0] sm:$0xf]
    %v177 = vld [vmem:[#allocation5 + $0xb4] sm:$0xf]
    %v178 = vld [vmem:[#allocation5 + $0xb8] sm:$0xf]
    %v179 = vld [vmem:[#allocation5 + $0xbc] sm:$0xf]
    %v180 = vld [vmem:[#allocation5 + $0xc0] sm:$0xf]
    %v181 = vld [vmem:[#allocation5 + $0xc4] sm:$0xf]
    %v182 = vld [vmem:[#allocation5 + $0xc8] sm:$0xf]
    %v183 = vld [vmem:[#allocation5 + $0xcc] sm:$0xf]
    %v184 = vld [vmem:[#allocation5 + $0xd0] sm:$0xf]
    %v185 = vld [vmem:[#allocation5 + $0xd4] sm:$0xf]
    %v186 = vld [vmem:[#allocation5 + $0xd8] sm:$0xf]
    %v187 = vld [vmem:[#allocation5 + $0xdc] sm:$0xf]
    %v188 = vld [vmem:[#allocation5 + $0xe0] sm:$0xf]
    %v189 = vld [vmem:[#allocation5 + $0xe4] sm:$0xf]
    %v190 = vld [vmem:[#allocation5 + $0xe8] sm:$0xf]
    %v191 = vld [vmem:[#allocation5 + $0xec] sm:$0xf]
    %v192 = vld [vmem:[#allocation5 + $0xf0] sm:$0xf]
    %v193 = vld [vmem:[#allocation5 + $0xf4] sm:$0xf]
    %v194 = vld [vmem:[#allocation5 + $0xf8] sm:$0xf]
    %v195 = vld [vmem:[#allocation5 + $0xfc] sm:$0xf]
    %v196 = vld [vmem:[#allocation5 + $0x100] sm:$0xf]
    %v197 = vld [vmem:[#allocation5 + $0x104] sm:$0xf]
    %v198 = vld [vmem:[#allocation5 + $0x108] sm:$0xf]
    %v199 = vld [vmem:[#allocation5 + $0x10c] sm:$0xf]
    %v200 = vld [vmem:[#allocation5 + $0x110] sm:$0xf]
    %v201 = vld [vmem:[#allocation5 + $0x114] sm:$0xf]
    %v202 = vld [vmem:[#allocation5 + $0x118] sm:$0xf]
    %v203 = vld [vmem:[#allocation5 + $0x11c] sm:$0xf]
    %v204 = vld [vmem:[#allocation5 + $0x120] sm:$0xf]
    %v205 = vld [vmem:[#allocation5 + $0x124] sm:$0xf]
    %v206 = vld [vmem:[#allocation5 + $0x128] sm:$0xf]
    %v207 = vld [vmem:[#allocation5 + $0x12c] sm:$0xf]
    %v208 = vld [vmem:[#allocation5 + $0x130] sm:$0xf]
    %v209 = vld [vmem:[#allocation5 + $0x134] sm:$0xf]
    %v210 = vld [vmem:[#allocation5 + $0x138] sm:$0xf]
    %v211 = vld [vmem:[#allocation5 + $0x13c] sm:$0xf]
    %v212 = vld [vmem:[#allocation5 + $0x140] sm:$0xf]
    %v213 = vld [vmem:[#allocation5 + $0x144] sm:$0xf]
    %v214 = vld [vmem:[#allocation5 + $0x148] sm:$0xf]
    %v215 = vld [vmem:[#allocation5 + $0x14c] sm:$0xf]
    %v216 = vld [vmem:[#allocation5 + $0x150] sm:$0xf]
    %v217 = vld [vmem:[#allocation5 + $0x154] sm:$0xf]
    %v218 = vld [vmem:[#allocation5 + $0x158] sm:$0xf]
    %v219 = vld [vmem:[#allocation5 + $0x15c] sm:$0xf]
    %v220 = vld [vmem:[#allocation5 + $0x160] sm:$0xf]
    %v221 = vld [vmem:[#allocation5 + $0x164] sm:$0xf]
    %v222 = vld [vmem:[#allocation5 + $0x168] sm:$0xf]
    %v223 = vld [vmem:[#allocation5 + $0x16c] sm:$0xf]
    %v224 = vld [vmem:[#allocation5 + $0x170] sm:$0xf]
    %v225 = vld [vmem:[#allocation5 + $0x174] sm:$0xf]
    %v226 = vld [vmem:[#allocation5 + $0x178] sm:$0xf]
    %v227 = vld [vmem:[#allocation5 + $0x17c] sm:$0xf]
    %v228 = vld [vmem:[#allocation5 + $0x180] sm:$0xf]
    %v229 = vld [vmem:[#allocation5 + $0x184] sm:$0xf]
    %v230 = vld [vmem:[%s2] sm:$0x1]
    %v232 = vlaneseq
    %v233 = vshrl.u32 %v232, 7
    %v234 = vsub.s32 0, %v233
    %v235 = vrot.slane %v230, %v234
    %v335 = vunpack.c.l.b16 %v132
    %v336 = vunpack.c.l.b16 %v133
    %v337 = vunpack.c.l.b16 %v134
    %v338 = vunpack.c.l.b16 %v135
    %v339 = vunpack.c.l.b16 %v136
    %v340 = vunpack.c.l.b16 %v137
    %v341 = vunpack.c.l.b16 %v138
    %v342 = vunpack.c.l.b16 %v139
    %v343 = vunpack.c.l.b16 %v140
    %v344 = vunpack.c.l.b16 %v141
    %v345 = vunpack.c.l.b16 %v142
    %v346 = vunpack.c.l.b16 %v143
    %v347 = vunpack.c.l.b16 %v144
    %v348 = vunpack.c.l.b16 %v145
    %v349 = vunpack.c.l.b16 %v146
    %v350 = vunpack.c.l.b16 %v147
    %v351 = vunpack.c.l.b16 %v148
    %v352 = vunpack.c.l.b16 %v149
    %v353 = vunpack.c.l.b16 %v150
    %v354 = vunpack.c.l.b16 %v151
    %v355 = vunpack.c.l.b16 %v152
    %v356 = vunpack.c.l.b16 %v153
    %v357 = vunpack.c.l.b16 %v154
    %v358 = vunpack.c.l.b16 %v155
    %v359 = vunpack.c.l.b16 %v156
    %v360 = vunpack.c.l.b16 %v157
    %v361 = vunpack.c.l.b16 %v158
    %v362 = vunpack.c.l.b16 %v159
    %v363 = vunpack.c.l.b16 %v160
    %v364 = vunpack.c.l.b16 %v161
    %v365 = vunpack.c.l.b16 %v162
    %v366 = vunpack.c.l.b16 %v163
    %v367 = vunpack.c.l.b16 %v164
    %v368 = vunpack.c.l.b16 %v165
    %v369 = vunpack.c.l.b16 %v166
    %v370 = vunpack.c.l.b16 %v167
    %v371 = vunpack.c.l.b16 %v168
    %v372 = vunpack.c.l.b16 %v169
    %v373 = vunpack.c.l.b16 %v170
    %v374 = vunpack.c.l.b16 %v171
    %v375 = vunpack.c.l.b16 %v172
    %v376 = vunpack.c.l.b16 %v173
    %v377 = vunpack.c.l.b16 %v174
    %v378 = vunpack.c.l.b16 %v175
    %v379 = vunpack.c.l.b16 %v176
    %v380 = vunpack.c.l.b16 %v177
    %v381 = vunpack.c.l.b16 %v178
    %v382 = vunpack.c.l.b16 %v179
    %v383 = vunpack.c.l.b16 %v180
    %v384 = vunpack.c.l.b16 %v181
    %v385 = vunpack.c.l.b16 %v182
    %v386 = vunpack.c.l.b16 %v183
    %v387 = vunpack.c.l.b16 %v184
    %v388 = vunpack.c.l.b16 %v185
    %v389 = vunpack.c.l.b16 %v186
    %v390 = vunpack.c.l.b16 %v187
    %v391 = vunpack.c.l.b16 %v188
    %v392 = vunpack.c.l.b16 %v189
    %v393 = vunpack.c.l.b16 %v190
    %v394 = vunpack.c.l.b16 %v191
    %v395 = vunpack.c.l.b16 %v192
    %v396 = vunpack.c.l.b16 %v193
    %v397 = vunpack.c.l.b16 %v194
    %v398 = vunpack.c.l.b16 %v195
    %v399 = vunpack.c.l.b16 %v196
    %v400 = vunpack.c.l.b16 %v197
    %v401 = vunpack.c.l.b16 %v198
    %v402 = vunpack.c.l.b16 %v199
    %v403 = vunpack.c.l.b16 %v200
    %v404 = vunpack.c.l.b16 %v201
    %v405 = vunpack.c.l.b16 %v202
    %v406 = vunpack.c.l.b16 %v203
    %v407 = vunpack.c.l.b16 %v204
    %v408 = vunpack.c.l.b16 %v205
    %v409 = vunpack.c.l.b16 %v206
    %v410 = vunpack.c.l.b16 %v207
    %v411 = vunpack.c.l.b16 %v208
    %v412 = vunpack.c.l.b16 %v209
    %v413 = vunpack.c.l.b16 %v210
    %v414 = vunpack.c.l.b16 %v211
    %v415 = vunpack.c.l.b16 %v212
    %v416 = vunpack.c.l.b16 %v213
    %v417 = vunpack.c.l.b16 %v214
    %v418 = vunpack.c.l.b16 %v215
    %v419 = vunpack.c.l.b16 %v216
    %v420 = vunpack.c.l.b16 %v217
    %v421 = vunpack.c.l.b16 %v218
    %v422 = vunpack.c.l.b16 %v219
    %v423 = vunpack.c.l.b16 %v220
    %v424 = vunpack.c.l.b16 %v221
    %v425 = vunpack.c.l.b16 %v222
    %v426 = vunpack.c.l.b16 %v223
    %v427 = vunpack.c.l.b16 %v224
    %v428 = vunpack.c.l.b16 %v225
    %v429 = vunpack.c.l.b16 %v226
    %v430 = vunpack.c.l.b16 %v227
    %v431 = vunpack.c.l.b16 %v228
    %v432 = vunpack.c.l.b16 %v229
    %v433 = vpack.c.b16 %v336, %v335
    %v434 = vpack.c.b16 %v338, %v337
    %v435 = vpack.c.b16 %v340, %v339
    %v436 = vpack.c.b16 %v342, %v341
    %v437 = vpack.c.b16 %v344, %v343
    %v438 = vpack.c.b16 %v346, %v345
    %v439 = vpack.c.b16 %v348, %v347
    %v440 = vpack.c.b16 %v350, %v349
    %v441 = vpack.c.b16 %v352, %v351
    %v442 = vpack.c.b16 %v354, %v353
    %v443 = vpack.c.b16 %v356, %v355
    %v444 = vpack.c.b16 %v358, %v357
    %v445 = vpack.c.b16 %v360, %v359
    %v446 = vpack.c.b16 %v362, %v361
    %v447 = vpack.c.b16 %v364, %v363
    %v448 = vpack.c.b16 %v366, %v365
    %v449 = vpack.c.b16 %v368, %v367
    %v450 = vpack.c.b16 %v370, %v369
    %v451 = vpack.c.b16 %v372, %v371
    %v452 = vpack.c.b16 %v374, %v373
    %v453 = vpack.c.b16 %v376, %v375
    %v454 = vpack.c.b16 %v378, %v377
    %v455 = vpack.c.b16 %v380, %v379
    %v456 = vpack.c.b16 %v382, %v381
    %v457 = vpack.c.b16 %v384, %v383
    %v458 = vpack.c.b16 %v386, %v385
    %v459 = vpack.c.b16 %v388, %v387
    %v460 = vpack.c.b16 %v390, %v389
    %v461 = vpack.c.b16 %v392, %v391
    %v462 = vpack.c.b16 %v394, %v393
    %v463 = vpack.c.b16 %v396, %v395
    %v464 = vpack.c.b16 %v398, %v397
    %v465 = vpack.c.b16 %v400, %v399
    %v466 = vpack.c.b16 %v402, %v401
    %v467 = vpack.c.b16 %v404, %v403
    %v468 = vpack.c.b16 %v406, %v405
    %v469 = vpack.c.b16 %v408, %v407
    %v470 = vpack.c.b16 %v410, %v409
    %v471 = vpack.c.b16 %v412, %v411
    %v472 = vpack.c.b16 %v414, %v413
    %v473 = vpack.c.b16 %v416, %v415
    %v474 = vpack.c.b16 %v418, %v417
    %v475 = vpack.c.b16 %v420, %v419
    %v476 = vpack.c.b16 %v422, %v421
    %v477 = vpack.c.b16 %v424, %v423
    %v478 = vpack.c.b16 %v426, %v425
    %v479 = vpack.c.b16 %v428, %v427
    %v480 = vpack.c.b16 %v430, %v429
    %v481 = vpack.c.b16 %v432, %v431
    %vm531 = vcmask 130048
    %v533 = vsel %vm531, %v131, 0
    %535 = vmatprep.subr.bf16.mxu0 0
    %536 = vmatpush1.bf16.msra.mxu0 %v433
    %537 = vmatprep.subr.bf16.mxu0 0
    %538 = vmatpush1.bf16.msra.mxu0 %v434
    %539 = vmatprep.subr.bf16.mxu0 0
    %540 = vmatpush1.bf16.msra.mxu0 %v435
    %541 = vmatprep.subr.bf16.mxu0 0
    %542 = vmatpush1.bf16.msra.mxu0 %v436
    %543 = vmatprep.subr.bf16.mxu0 0
    %544 = vmatpush1.bf16.msra.mxu0 %v437
    %545 = vmatprep.subr.bf16.mxu0 0
    %546 = vmatpush1.bf16.msra.mxu0 %v438
    %547 = vmatprep.subr.bf16.mxu0 0
    %548 = vmatpush1.bf16.msra.mxu0 %v439
    %549 = vmatprep.subr.bf16.mxu0 0
    %550 = vmatpush1.bf16.msra.mxu0 %v440
    %551 = vmatprep.subr.bf16.mxu0 0
    %552 = vmatpush1.bf16.msra.mxu0 %v441
    %553 = vmatprep.subr.bf16.mxu0 0
    %554 = vmatpush1.bf16.msra.mxu0 %v442
    %555 = vmatprep.subr.bf16.mxu0 0
    %556 = vmatpush1.bf16.msra.mxu0 %v443
    %557 = vmatprep.subr.bf16.mxu0 0
    %558 = vmatpush1.bf16.msra.mxu0 %v444
    %559 = vmatprep.subr.bf16.mxu0 0
    %560 = vmatpush1.bf16.msra.mxu0 %v445
    %561 = vmatprep.subr.bf16.mxu0 0
    %562 = vmatpush1.bf16.msra.mxu0 %v446
    %563 = vmatprep.subr.bf16.mxu0 0
    %564 = vmatpush1.bf16.msra.mxu0 %v447
    %565 = vmatprep.subr.bf16.mxu0 0
    %566 = vmatpush1.bf16.msra.mxu0 %v448
    %567 = vmatprep.mubr.bf16.mxu0 %v126
    %568 = vmatmul.mubr.bf16.gmra.mrb[0].mxu0 %v125
    %v569 = vpop.f32.mrb[0].mxu0
    %v570 = vadd.f32 %v235, %v569
    %v571 = vpop.f32.mrb[0].mxu0
    %v572 = vpop.f32.mrb[0].mxu0
    %v573 = vpop.f32.mrb[0].mxu0
    %574 = vdwg.mxu0
    %575 = vmatprep.subr.bf16.mxu0 0
    %576 = vmatpush1.bf16.msra.mxu0 %v449
    %577 = vmatprep.subr.bf16.mxu0 0
    %578 = vmatpush1.bf16.msra.mxu0 %v450
    %579 = vmatprep.subr.bf16.mxu0 0
    %580 = vmatpush1.bf16.msra.mxu0 %v451
    %581 = vmatprep.subr.bf16.mxu0 0
    %582 = vmatpush1.bf16.msra.mxu0 %v452
    %583 = vmatprep.subr.bf16.mxu0 0
    %584 = vmatpush1.bf16.msra.mxu0 %v453
    %585 = vmatprep.subr.bf16.mxu0 0
    %586 = vmatpush1.bf16.msra.mxu0 %v454
    %587 = vmatprep.subr.bf16.mxu0 0
    %588 = vmatpush1.bf16.msra.mxu0 %v455
    %589 = vmatprep.subr.bf16.mxu0 0
    %590 = vmatpush1.bf16.msra.mxu0 %v456
    %591 = vmatprep.subr.bf16.mxu0 0
    %592 = vmatpush1.bf16.msra.mxu0 %v457
    %593 = vmatprep.subr.bf16.mxu0 0
    %594 = vmatpush1.bf16.msra.mxu0 %v458
    %595 = vmatprep.subr.bf16.mxu0 0
    %596 = vmatpush1.bf16.msra.mxu0 %v459
    %597 = vmatprep.subr.bf16.mxu0 0
    %598 = vmatpush1.bf16.msra.mxu0 %v460
    %599 = vmatprep.subr.bf16.mxu0 0
    %600 = vmatpush1.bf16.msra.mxu0 %v461
    %601 = vmatprep.subr.bf16.mxu0 0
    %602 = vmatpush1.bf16.msra.mxu0 %v462
    %603 = vmatprep.subr.bf16.mxu0 0
    %604 = vmatpush1.bf16.msra.mxu0 %v463
    %605 = vmatprep.subr.bf16.mxu0 0
    %606 = vmatpush1.bf16.msra.mxu0 %v464
    %607 = vmatprep.mubr.bf16.mxu0 %v128
    %608 = vmatmul.mubr.bf16.gmra.mrb[0].mxu0 %v127
    %v609 = vpop.f32.mrb[0].mxu0
    %v610 = vadd.f32 %v570, %v609
    %v611 = vpop.f32.mrb[0].mxu0
    %v612 = vpop.f32.mrb[0].mxu0
    %v613 = vpop.f32.mrb[0].mxu0
    %614 = vdwg.mxu0
    %615 = vmatprep.subr.bf16.mxu0 0
    %616 = vmatpush1.bf16.msra.mxu0 %v465
    %617 = vmatprep.subr.bf16.mxu0 0
    %618 = vmatpush1.bf16.msra.mxu0 %v466
    %619 = vmatprep.subr.bf16.mxu0 0
    %620 = vmatpush1.bf16.msra.mxu0 %v467
    %621 = vmatprep.subr.bf16.mxu0 0
    %622 = vmatpush1.bf16.msra.mxu0 %v468
    %623 = vmatprep.subr.bf16.mxu0 0
    %624 = vmatpush1.bf16.msra.mxu0 %v469
    %625 = vmatprep.subr.bf16.mxu0 0
    %626 = vmatpush1.bf16.msra.mxu0 %v470
    %627 = vmatprep.subr.bf16.mxu0 0
    %628 = vmatpush1.bf16.msra.mxu0 %v471
    %629 = vmatprep.subr.bf16.mxu0 0
    %630 = vmatpush1.bf16.msra.mxu0 %v472
    %631 = vmatprep.subr.bf16.mxu0 0
    %632 = vmatpush1.bf16.msra.mxu0 %v473
    %633 = vmatprep.subr.bf16.mxu0 0
    %634 = vmatpush1.bf16.msra.mxu0 %v474
    %635 = vmatprep.subr.bf16.mxu0 0
    %636 = vmatpush1.bf16.msra.mxu0 %v475
    %637 = vmatprep.subr.bf16.mxu0 0
    %638 = vmatpush1.bf16.msra.mxu0 %v476
    %639 = vmatprep.subr.bf16.mxu0 0
    %640 = vmatpush1.bf16.msra.mxu0 %v477
    %641 = vmatprep.subr.bf16.mxu0 0
    %642 = vmatpush1.bf16.msra.mxu0 %v478
    %643 = vmatprep.subr.bf16.mxu0 0
    %644 = vmatpush1.bf16.msra.mxu0 %v479
    %645 = vmatprep.subr.bf16.mxu0 0
    %646 = vmatpush1.bf16.msra.mxu0 %v480
    %647 = vmatprep.mubr.bf16.mxu0 %v130
    %648 = vmatmul.mubr.bf16.gmra.mrb[0].mxu0 %v129
    %v649 = vpop.f32.mrb[0].mxu0
    %v650 = vadd.f32 %v610, %v649
    %v651 = vpop.f32.mrb[0].mxu0
    %v652 = vpop.f32.mrb[0].mxu0
    %v653 = vpop.f32.mrb[0].mxu0
    %654 = vdwg.mxu0
    %655 = vmatprep.subr.bf16.mxu0 0
    %656 = vmatpush1.bf16.msra.mxu0 %v481
    %657 = vmatprep.subr.bf16.mxu0 0
    %658 = vmatpush1.bf16.msra.mxu0 0
    %659 = vmatprep.subr.bf16.mxu0 0
    %660 = vmatpush1.bf16.msra.mxu0 0
    %661 = vmatprep.subr.bf16.mxu0 0
    %662 = vmatpush1.bf16.msra.mxu0 0
    %663 = vmatprep.subr.bf16.mxu0 0
    %664 = vmatpush1.bf16.msra.mxu0 0
    %665 = vmatprep.subr.bf16.mxu0 0
    %666 = vmatpush1.bf16.msra.mxu0 0
    %667 = vmatprep.subr.bf16.mxu0 0
    %668 = vmatpush1.bf16.msra.mxu0 0
    %669 = vmatprep.subr.bf16.mxu0 0
    %670 = vmatpush1.bf16.msra.mxu0 0
    %671 = vmatprep.subr.bf16.mxu0 0
    %672 = vmatpush1.bf16.msra.mxu0 0
    %673 = vmatprep.subr.bf16.mxu0 0
    %674 = vmatpush1.bf16.msra.mxu0 0
    %675 = vmatprep.subr.bf16.mxu0 0
    %676 = vmatpush1.bf16.msra.mxu0 0
    %677 = vmatprep.subr.bf16.mxu0 0
    %678 = vmatpush1.bf16.msra.mxu0 0
    %679 = vmatprep.subr.bf16.mxu0 0
    %680 = vmatpush1.bf16.msra.mxu0 0
    %681 = vmatprep.subr.bf16.mxu0 0
    %682 = vmatpush1.bf16.msra.mxu0 0
    %683 = vmatprep.subr.bf16.mxu0 0
    %684 = vmatpush1.bf16.msra.mxu0 0
    %685 = vmatprep.subr.bf16.mxu0 0
    %686 = vmatpush1.bf16.msra.mxu0 0
    %687 = vmatprep.mubr.bf16.mxu0 0
    %688 = vmatmul.mubr.bf16.gmra.mrb[0].mxu0 %v533
    %v689 = vpop.f32.mrb[0].mxu0
    %v690 = vadd.f32 %v650, %v689
    %v691 = vpop.f32.mrb[0].mxu0
    %v692 = vpop.f32.mrb[0].mxu0
    %v693 = vpop.f32.mrb[0].mxu0
    %694 = vdwg.mxu0
    %v695 = vmax.f32 %v690, 0.0
    %v696 = vpack.c.bf16 %v695, %v695
    %v697 = vld [vmem:[#allocation7] sm:$0xf]
    %v698 = vld [vmem:[#allocation7 + $0x4] sm:$0xf]
    %v699 = vld [vmem:[#allocation7 + $0x8] sm:$0xf]
    %v700 = vld [vmem:[#allocation7 + $0xc] sm:$0xf]
    %v701 = vld [vmem:[#allocation7 + $0x10] sm:$0xf]
    %v702 = vld [vmem:[#allocation7 + $0x14] sm:$0xf]
    %v703 = vld [vmem:[#allocation7 + $0x18] sm:$0xf]
    %v704 = vld [vmem:[#allocation7 + $0x1c] sm:$0xf]
    %v705 = vld [vmem:[#allocation7 + $0x20] sm:$0xf]
    %v706 = vld [vmem:[#allocation7 + $0x24] sm:$0xf]
    %v707 = vld [vmem:[#allocation7 + $0x28] sm:$0xf]
    %v708 = vld [vmem:[#allocation7 + $0x2c] sm:$0xf]
    %v709 = vld [vmem:[#allocation7 + $0x30] sm:$0xf]
    %v710 = vld [vmem:[#allocation7 + $0x34] sm:$0xf]
    %v711 = vld [vmem:[#allocation7 + $0x38] sm:$0xf]
    %v712 = vld [vmem:[#allocation7 + $0x3c] sm:$0xf]
    %v713 = vld [vmem:[%s4] sm:$0x1]
    %v715 = vlaneseq
    %v716 = vshrl.u32 %v715, 7
    %v717 = vsub.s32 0, %v716
    %v718 = vrot.slane %v713, %v717
    %v736 = vunpack.c.l.b16 %v697
    %v737 = vunpack.c.l.b16 %v698
    %v738 = vunpack.c.l.b16 %v699
    %v739 = vunpack.c.l.b16 %v700
    %v740 = vunpack.c.l.b16 %v701
    %v741 = vunpack.c.l.b16 %v702
    %v742 = vunpack.c.l.b16 %v703
    %v743 = vunpack.c.l.b16 %v704
    %v744 = vunpack.c.l.b16 %v705
    %v745 = vunpack.c.l.b16 %v706
    %v746 = vunpack.c.l.b16 %v707
    %v747 = vunpack.c.l.b16 %v708
    %v748 = vunpack.c.l.b16 %v709
    %v749 = vunpack.c.l.b16 %v710
    %v750 = vunpack.c.l.b16 %v711
    %v751 = vunpack.c.l.b16 %v712
    %v752 = vpack.c.b16 %v737, %v736
    %v753 = vpack.c.b16 %v739, %v738
    %v754 = vpack.c.b16 %v741, %v740
    %v755 = vpack.c.b16 %v743, %v742
    %v756 = vpack.c.b16 %v745, %v744
    %v757 = vpack.c.b16 %v747, %v746
    %v758 = vpack.c.b16 %v749, %v748
    %v759 = vpack.c.b16 %v751, %v750
    %768 = vmatprep.subr.bf16.mxu0 0
    %769 = vmatpush1.bf16.msra.mxu0 %v752
    %770 = vmatprep.subr.bf16.mxu0 0
    %771 = vmatpush1.bf16.msra.mxu0 %v753
    %772 = vmatprep.subr.bf16.mxu0 0
    %773 = vmatpush1.bf16.msra.mxu0 %v754
    %774 = vmatprep.subr.bf16.mxu0 0
    %775 = vmatpush1.bf16.msra.mxu0 %v755
    %776 = vmatprep.subr.bf16.mxu0 0
    %777 = vmatpush1.bf16.msra.mxu0 %v756
    %778 = vmatprep.subr.bf16.mxu0 0
    %779 = vmatpush1.bf16.msra.mxu0 %v757
    %780 = vmatprep.subr.bf16.mxu0 0
    %781 = vmatpush1.bf16.msra.mxu0 %v758
    %782 = vmatprep.subr.bf16.mxu0 0
    %783 = vmatpush1.bf16.msra.mxu0 %v759
    %784 = vmatprep.subr.bf16.mxu0 0
    %785 = vmatpush1.bf16.msra.mxu0 0
    %786 = vmatprep.subr.bf16.mxu0 0
    %787 = vmatpush1.bf16.msra.mxu0 0
    %788 = vmatprep.subr.bf16.mxu0 0
    %789 = vmatpush1.bf16.msra.mxu0 0
    %790 = vmatprep.subr.bf16.mxu0 0
    %791 = vmatpush1.bf16.msra.mxu0 0
    %792 = vmatprep.subr.bf16.mxu0 0
    %793 = vmatpush1.bf16.msra.mxu0 0
    %794 = vmatprep.subr.bf16.mxu0 0
    %795 = vmatpush1.bf16.msra.mxu0 0
    %796 = vmatprep.subr.bf16.mxu0 0
    %797 = vmatpush1.bf16.msra.mxu0 0
    %798 = vmatprep.subr.bf16.mxu0 0
    %799 = vmatpush1.bf16.msra.mxu0 0
    %800 = vmatprep.mubr.bf16.mxu0 0
    %801 = vmatmul.mubr.bf16.gmra.mrb[0].mxu0 %v696
    %v802 = vpop.f32.mrb[0].mxu0
    %v803 = vadd.f32 %v718, %v802
    %v804 = vpop.f32.mrb[0].mxu0
    %v805 = vpop.f32.mrb[0].mxu0
    %v806 = vpop.f32.mrb[0].mxu0
    %807 = vdwg.mxu0
    %v808 = vmax.f32 %v803, 0.0
    %v809 = vpack.c.bf16 %v808, %v808
    %v810 = vld [vmem:[#allocation8] sm:$0xf]
    %v811 = vld [vmem:[#allocation8 + $0x4] sm:$0xf]
    %v812 = vld [vmem:[#allocation8 + $0x8] sm:$0xf]
    %v813 = vld [vmem:[#allocation8 + $0xc] sm:$0xf]
    %v814 = vld [vmem:[#allocation8 + $0x10] sm:$0xf]
    %v815 = vld [vmem:[#allocation8 + $0x14] sm:$0xf]
    %v816 = vld [vmem:[#allocation8 + $0x18] sm:$0xf]
    %v817 = vld [vmem:[#allocation8 + $0x1c] sm:$0xf]
    %v818 = vld [vmem:[#allocation8 + $0x20] sm:$0xf]
    %v819 = vld [vmem:[#allocation8 + $0x24] sm:$0xf]
    %v820 = vld [vmem:[#allocation8 + $0x28] sm:$0xf]
    %v821 = vld [vmem:[#allocation8 + $0x2c] sm:$0xf]
    %v822 = vld [vmem:[#allocation8 + $0x30] sm:$0xf]
    %v823 = vld [vmem:[#allocation8 + $0x34] sm:$0xf]
    %v824 = vld [vmem:[#allocation8 + $0x38] sm:$0xf]
    %v825 = vld [vmem:[#allocation8 + $0x3c] sm:$0xf]
    %v826 = vld [vmem:[%s6] sm:$0x1]
    %v828 = vlaneseq
    %v829 = vshrl.u32 %v828, 7
    %v830 = vsub.s32 0, %v829
    %v831 = vrot.slane %v826, %v830
    %v849 = vunpack.c.l.b16 %v810
    %v850 = vunpack.c.l.b16 %v811
    %v851 = vunpack.c.l.b16 %v812
    %v852 = vunpack.c.l.b16 %v813
    %v853 = vunpack.c.l.b16 %v814
    %v854 = vunpack.c.l.b16 %v815
    %v855 = vunpack.c.l.b16 %v816
    %v856 = vunpack.c.l.b16 %v817
    %v857 = vunpack.c.l.b16 %v818
    %v858 = vunpack.c.l.b16 %v819
    %v859 = vunpack.c.l.b16 %v820
    %v860 = vunpack.c.l.b16 %v821
    %v861 = vunpack.c.l.b16 %v822
    %v862 = vunpack.c.l.b16 %v823
    %v863 = vunpack.c.l.b16 %v824
    %v864 = vunpack.c.l.b16 %v825
    %v865 = vpack.c.b16 %v850, %v849
    %v866 = vpack.c.b16 %v852, %v851
    %v867 = vpack.c.b16 %v854, %v853
    %v868 = vpack.c.b16 %v856, %v855
    %v869 = vpack.c.b16 %v858, %v857
    %v870 = vpack.c.b16 %v860, %v859
    %v871 = vpack.c.b16 %v862, %v861
    %v872 = vpack.c.b16 %v864, %v863
    %881 = vmatprep.subr.bf16.mxu0 0
    %882 = vmatpush1.bf16.msra.mxu0 %v865
    %883 = vmatprep.subr.bf16.mxu0 0
    %884 = vmatpush1.bf16.msra.mxu0 %v866
    %885 = vmatprep.subr.bf16.mxu0 0
    %886 = vmatpush1.bf16.msra.mxu0 %v867
    %887 = vmatprep.subr.bf16.mxu0 0
    %888 = vmatpush1.bf16.msra.mxu0 %v868
    %889 = vmatprep.subr.bf16.mxu0 0
    %890 = vmatpush1.bf16.msra.mxu0 %v869
    %891 = vmatprep.subr.bf16.mxu0 0
    %892 = vmatpush1.bf16.msra.mxu0 %v870
    %893 = vmatprep.subr.bf16.mxu0 0
    %894 = vmatpush1.bf16.msra.mxu0 %v871
    %895 = vmatprep.subr.bf16.mxu0 0
    %896 = vmatpush1.bf16.msra.mxu0 %v872
    %897 = vmatprep.subr.bf16.mxu0 0
    %898 = vmatpush1.bf16.msra.mxu0 0
    %899 = vmatprep.subr.bf16.mxu0 0
    %900 = vmatpush1.bf16.msra.mxu0 0
    %901 = vmatprep.subr.bf16.mxu0 0
    %902 = vmatpush1.bf16.msra.mxu0 0
    %903 = vmatprep.subr.bf16.mxu0 0
    %904 = vmatpush1.bf16.msra.mxu0 0
    %905 = vmatprep.subr.bf16.mxu0 0
    %906 = vmatpush1.bf16.msra.mxu0 0
    %907 = vmatprep.subr.bf16.mxu0 0
    %908 = vmatpush1.bf16.msra.mxu0 0
    %909 = vmatprep.subr.bf16.mxu0 0
    %910 = vmatpush1.bf16.msra.mxu0 0
    %911 = vmatprep.subr.bf16.mxu0 0
    %912 = vmatpush1.bf16.msra.mxu0 0
    %913 = vmatprep.mubr.bf16.mxu0 0
    %914 = vmatmul.mubr.bf16.gmra.mrb[0].mxu0 %v809
    %v915 = vpop.f32.mrb[0].mxu0
    %v916 = vadd.f32 %v831, %v915
    %v917 = vpop.f32.mrb[0].mxu0
    %v918 = vpop.f32.mrb[0].mxu0
    %v919 = vpop.f32.mrb[0].mxu0
    %920 = vdwg.mxu0
    %vm921 = vcmask 1041408
    %v922 = vsel %vm921, %v916, -inf
    %923 = vmax.xlane.f32.xlu0 %v922
    %v924 = vpop.xlane.xlu0 %923
    %v925 = vsub.f32 %v916, %v924
    %v926 = vmul.f32 %v925, 1.442695
    %v927 = vpow.pop %v926
    %v928 = vsel %vm921, %v927, 0.0
    %929 = vadd.xlane.f32.xlu0 %v928
    %v930 = vpop.xlane.xlu0 %929
    %v931 = vlog2.pop %v930
    %v932 = vmul.f32 %v931, 0.6931472
    %v933 = vsub.f32 %v925, %v932
    %934 = vst [vmem:[#allocation10] sm:$0x3] %v933
    // Predicated region
    $region46: #{tpu_custom_call.1} parent=1 // pred_check
      _
    $region47: #{tpu_custom_call.1} parent=1 // pred_check_branch
      %936 = sbr.rel (0) target = $region49
    $region48: #{tpu_custom_call.1} parent=1 // pred_region
      %s938 = ssub.s32 32, 32
      %939 = vsyncadd [#allocation4], %s938
      %s941 = sshll.u32 [#allocation10], 4
      %s942 = int_to_ptr.vmem [resolvable:$true] %s941
      %944 = dma.vmem_to_hbm [thread:$0]  %s942, 32, %s7, [#allocation4]
    $region49: #{tpu_custom_call.1} parent=1 // pred_fallthru
      _
    // Predicated region
    $region50: #{tpu_custom_call.1} parent=1 // pred_check
      _
    $region51: #{tpu_custom_call.1} parent=1 // pred_check_branch
      %946 = sbr.rel (0) target = $region53
    $region52: #{tpu_custom_call.1} parent=1 // pred_region
      %947 = dma.done [#allocation4], 32
    $region53: #{tpu_custom_call.1} parent=1 // pred_fallthru
      _
    %948 = vsyncpa [#allocation3], 1
    %949 = vsyncpa [#allocation6], 1
    %950 = vsyncpa [#allocation9], 1
    %951 = vsyncpa [#allocation4], 1

</llo_original>
